<compile_context>
chip_gen: v7x
topology: tpu7x:2x2x1
jax: 0.10.0
libtpu: 0.0.40
codegen_flags: <defaults>
</compile_context>

<pallas_src>
import numpy as np

import jax
import jax.numpy as jnp
from jax.experimental import pallas as pl
from jax.experimental.pallas import tpu as pltpu


# ---------------------------------------------------------------------------
# Weight preprocessing (runs ONCE at init -- not on the forward hot path):
# fold each ConvTranspose2d into its dense operator matrix.
# ---------------------------------------------------------------------------
def _conv_transpose_as_matrix(w, stride, padding, in_hw):
    """Dense operator M such that  flat_out = flat_in @ M  for a bias-free
    PyTorch ConvTranspose2d with weight layout (Cin, Cout, K, K).

    flat_in is ordered (ci, iy, ix); flat_out is ordered (co, oy, ox),
    i.e. both are row-major flattenings of NCHW activations.
    PyTorch ConvTranspose2d:  oy = iy*stride - padding + ky  (same for x).
    """
    cin, cout, k, _ = w.shape
    hi, wi = in_hw
    ho = (hi - 1) * stride - 2 * padding + k
    wo = (wi - 1) * stride - 2 * padding + k
    wn = np.asarray(w, np.float32)
    m = np.zeros((cin, hi, wi, cout, ho, wo), np.float32)
    for iy in range(hi):
        for ix in range(wi):
            for ky in range(k):
                for kx in range(k):
                    oy = iy * stride - padding + ky
                    ox = ix * stride - padding + kx
                    if 0 <= oy < ho and 0 <= ox < wo:
                        m[:, iy, ix, :, oy, ox] += wn[:, :, ky, kx]
    return m.reshape(cin * hi * wi, cout * ho * wo), (ho, wo)


def init_params(key, input_size, n_channels, ngf, n_layers):
    """Sample ConvTranspose2d weights (PyTorch kaiming-uniform style) and fold
    each layer into its dense operator matrix (hoisted out of forward)."""
    ngf = ngf * 2 ** (n_layers - 2)
    layer_specs = [(input_size, ngf, 3, 1, 0)]            # (cin, cout, k, stride, pad)
    for _ in range(1, n_layers - 1):
        layer_specs.append((ngf, ngf // 2, 3, 1, 0))
        ngf //= 2
    layer_specs.append((ngf, n_channels, 4, 2, 1))

    weights, matrices = [], []
    hw = (1, 1)
    for (cin, cout, k, s, p) in layer_specs:
        key, sub = jax.random.split(key)
        # PyTorch default kaiming_uniform_(a=sqrt(5)) for ConvTranspose2d:
        # bound = 1/sqrt(fan_in) with fan_in = Cout*K*K for (Cin,Cout,K,K) weights.
        bound = 1.0 / np.sqrt(cout * k * k)
        w = jax.random.uniform(sub, (cin, cout, k, k), jnp.float32, -bound, bound)
        m, hw = _conv_transpose_as_matrix(w, s, p, hw)
        weights.append((w, s, p))
        matrices.append(jnp.asarray(m))
    return {
        "weights": tuple(weights),            # raw PyTorch-layout weights (reference)
        "matrices": tuple(matrices),          # dense operators used by the kernel
        "out_chw": (n_channels, hw[0], hw[1]),
    }


# ---------------------------------------------------------------------------
# Fused Pallas kernel: the entire decoder forward pass.
# ---------------------------------------------------------------------------
def _decoder_kernel(x_ref, m1_ref, m2_ref, m3_ref, o_ref):
    # Layer 1: (B,32) @ (32,144)  == ConvTranspose2d(32,16,3,1) on a 1x1 input.
    h = jnp.dot(x_ref[...], m1_ref[...], preferred_element_type=jnp.float32)
    h = jnp.maximum(h, 0.0)                                    # ReLU
    # Layer 2: (B,144) @ (144,200) == ConvTranspose2d(16,8,3,1).
    h = jnp.dot(h, m2_ref[...], preferred_element_type=jnp.float32)
    h = jnp.maximum(h, 0.0)                                    # ReLU
    # Layer 3: (B,200) @ (200,400) == ConvTranspose2d(8,4,4,2,1), fused Sigmoid.
    h = jnp.dot(h, m3_ref[...], preferred_element_type=jnp.float32)
    o_ref[...] = (1.0 / (1.0 + jnp.exp(-h))).astype(o_ref.dtype)


_BATCH_TILE = 256   # batch tile for the large-B grid path (sized for v7x 64 MiB VMEM)


def decoder_fused(x2d, m1, m2, m3):
    """x2d: (B, input_size) f32 latents -> (B, Cout*Ho*Wo) f32, (c,oy,ox) ordering."""
    b, k1 = x2d.shape
    n_out = m3.shape[1]
    out_shape = jax.ShapeDtypeStruct((b, n_out), jnp.float32)

    if b <= _BATCH_TILE:
        # Whole problem is one VMEM-resident tile: no grid, no pipeline overhead.
        vspec = pl.BlockSpec(memory_space=pltpu.MemorySpace.VMEM)
        return pl.pallas_call(
            _decoder_kernel,
            out_shape=out_shape,
            in_specs=[vspec, vspec, vspec, vspec],
            out_specs=vspec,
        )(x2d, m1, m2, m3)

    # Large batch: tile B and shard across TensorCores; weights pinned to block (0,0).
    grid = (pl.cdiv(b, _BATCH_TILE),)
    return pl.pallas_call(
        _decoder_kernel,
        out_shape=out_shape,
        grid=grid,
        in_specs=[
            pl.BlockSpec((_BATCH_TILE, k1), lambda i: (i, 0)),
            pl.BlockSpec(m1.shape, lambda i: (0, 0)),
            pl.BlockSpec(m2.shape, lambda i: (0, 0)),
            pl.BlockSpec(m3.shape, lambda i: (0, 0)),
        ],
        out_specs=pl.BlockSpec((_BATCH_TILE, n_out), lambda i: (i, 0)),
        compiler_params=pltpu.CompilerParams(dimension_semantics=("parallel",)),
    )(x2d, m1, m2, m3)


def image_decoder_forward(x, params):
    """Matches ImageDecoderModified.forward (norm='None').
    Accepts (B, input_size) latents or (B, input_size, 1, 1)."""
    if x.ndim == 4:
        # The DCGAN decoder consumes 1x1-spatial latents; operators were folded
        # for that input size.
        assert x.shape[2] == 1 and x.shape[3] == 1, x.shape
        x = x.reshape(x.shape[0], x.shape[1])
    m1, m2, m3 = params["matrices"]
    out_flat = decoder_fused(x, m1, m2, m3)           # (B, C*Ho*Wo), (c,oy,ox) order
    c, h, w = params["out_chw"]
    return out_flat.reshape(x.shape[0], c, h, w)      # NCHW: pure reshape, no transpose


# ---------------------------------------------------------------------------
# Pure-XLA reference (independent path via lax.conv_general_dilated), used only
# to validate the fused kernel / operator folding.
# ---------------------------------------------------------------------------
def _reference_forward(x, params):
    h = x.reshape(x.shape[0], x.shape[1], 1, 1)
    n = len(params["weights"])
    for i, (w, s, p) in enumerate(params["weights"]):
        k = w.shape[2]
        kern = jnp.flip(w, (2, 3)).transpose(1, 0, 2, 3)        # (Cout, Cin, K, K)
        h = jax.lax.conv_general_dilated(
            h, kern, window_strides=(1, 1),
            padding=[(k - 1 - p, k - 1 - p)] * 2,
            lhs_dilation=(s, s),
            dimension_numbers=("NCHW", "OIHW", "NCHW"),
            precision=jax.lax.Precision.HIGHEST)
        h = jax.nn.sigmoid(h) if i == n - 1 else jnp.maximum(h, 0.0)
    return h


if __name__ == "__main__":
    input_size, n_channels, ngf, n_layers = 32, 4, 8, 3

    key = jax.random.PRNGKey(0)
    kx, kp = jax.random.split(key)
    params = init_params(kp, input_size, n_channels, ngf, n_layers)

    # 2-D latent input (B, input_size) -- forward views it as (B, input_size, 1, 1)
    x = jax.random.normal(kx, (2, input_size), jnp.float32)

    out = image_decoder_forward(x, params)
    out = jax.block_until_ready(out)

    assert out.shape == (2, n_channels, 10, 10), out.shape
    assert bool(jnp.all(jnp.isfinite(out)))
    assert bool(jnp.all((out >= 0.0) & (out <= 1.0)))           # sigmoid output range

    # Validate against the independent XLA conv-transpose reference. Loose tolerance
    # only to accommodate possible reduced-precision f32 MXU pass decomposition;
    # any structural/ordering bug would produce O(0.1) errors.
    ref = _reference_forward(x, params)
    assert bool(jnp.allclose(out, ref, atol=1e-2)), float(jnp.max(jnp.abs(out - ref)))

    print("KERNEL_OK")
</pallas_src>

<mosaic_0001>
module attributes {stable_mosaic.version = 11 : i64} {
  func.func @_decoder_kernel(%arg0: memref<2x32xf32, #tpu.memory_space<vmem>>, %arg1: memref<32x144xf32, #tpu.memory_space<vmem>>, %arg2: memref<144x200xf32, #tpu.memory_space<vmem>>, %arg3: memref<200x400xf32, #tpu.memory_space<vmem>>, %arg4: memref<2x400xf32, #tpu.memory_space<vmem>>) attributes {dimension_semantics = [], scalar_prefetch = 0 : i64, scratch_operands = 0 : i64, tpu.core_type = #tpu.core_type<tc>} {
    %c0 = arith.constant 0 : index
    %c0_0 = arith.constant 0 : index
    %0 = vector.load %arg0[%c0, %c0_0] : memref<2x32xf32, #tpu.memory_space<vmem>>, vector<2x32xf32>
    %c0_1 = arith.constant 0 : index
    %c0_2 = arith.constant 0 : index
    %1 = vector.load %arg1[%c0_1, %c0_2] : memref<32x144xf32, #tpu.memory_space<vmem>>, vector<32x144xf32>
    %cst = arith.constant dense<0.000000e+00> : vector<2x144xf32>
    %2 = tpu.matmul %0, %1, %cst {dimension_numbers = #tpu.dot_dimension_numbers<[1], [0], [0], [1], [0, 0, 1, 1], [], []>} : vector<2x32xf32>, vector<32x144xf32>, vector<2x144xf32> -> vector<2x144xf32>
    %cst_3 = arith.constant 0.000000e+00 : f32
    %3 = vector.broadcast %cst_3 : f32 to vector<2x144xf32>
    %4 = arith.maximumf %2, %3 : vector<2x144xf32>
    %c0_4 = arith.constant 0 : index
    %c0_5 = arith.constant 0 : index
    %5 = vector.load %arg2[%c0_4, %c0_5] : memref<144x200xf32, #tpu.memory_space<vmem>>, vector<144x200xf32>
    %cst_6 = arith.constant dense<0.000000e+00> : vector<2x200xf32>
    %6 = tpu.matmul %4, %5, %cst_6 {dimension_numbers = #tpu.dot_dimension_numbers<[1], [0], [0], [1], [0, 0, 1, 1], [], []>} : vector<2x144xf32>, vector<144x200xf32>, vector<2x200xf32> -> vector<2x200xf32>
    %cst_7 = arith.constant 0.000000e+00 : f32
    %7 = vector.broadcast %cst_7 : f32 to vector<2x200xf32>
    %8 = arith.maximumf %6, %7 : vector<2x200xf32>
    %c0_8 = arith.constant 0 : index
    %c0_9 = arith.constant 0 : index
    %9 = vector.load %arg3[%c0_8, %c0_9] : memref<200x400xf32, #tpu.memory_space<vmem>>, vector<200x400xf32>
    %cst_10 = arith.constant dense<0.000000e+00> : vector<2x400xf32>
    %10 = tpu.matmul %8, %9, %cst_10 {dimension_numbers = #tpu.dot_dimension_numbers<[1], [0], [0], [1], [0, 0, 1, 1], [], []>} : vector<2x200xf32>, vector<200x400xf32>, vector<2x400xf32> -> vector<2x400xf32>
    %cst_11 = arith.constant 0.000000e+00 : f32
    %11 = vector.broadcast %cst_11 : f32 to vector<2x400xf32>
    %12 = arith.subf %11, %10 : vector<2x400xf32>
    %13 = math.exp %12 : vector<2x400xf32>
    %cst_12 = arith.constant 1.000000e+00 : f32
    %14 = vector.broadcast %cst_12 : f32 to vector<2x400xf32>
    %15 = arith.addf %14, %13 : vector<2x400xf32>
    %cst_13 = arith.constant 1.000000e+00 : f32
    %16 = vector.broadcast %cst_13 : f32 to vector<2x400xf32>
    %17 = arith.divf %16, %15 : vector<2x400xf32>
    %c0_14 = arith.constant 0 : index
    %c0_15 = arith.constant 0 : index
    %18 = vector.load %arg4[%c0_14, %c0_15] : memref<2x400xf32, #tpu.memory_space<vmem>>, vector<2x400xf32>
    tpu.vector_store %arg4[%c0_14, %c0_15], %17 {strides = array<i32>} : memref<2x400xf32, #tpu.memory_space<vmem>>, vector<2x400xf32>,
    return
  }
}

</mosaic_0001>

<llo_original>
// kernel: tpu_custom_call.1
$region0: #{tpu_custom_call.1}
  #allocation0 [shape = 'u32[]', space=smem, size = 0x4, offset = 0x4, fixed_abs, tag = 'smem constant byte address 0x4 - core index']
  #allocation1 [shape = 'u32[144,128]{1,0:T(1,128)}', space=vmem, size = 0x12000, scoped, tag = 'internal scratch']
  %s0 = inlined_call_operand.hbm [shape: f32[2,32], index: 0, kind: input, shape index: {}]
  %s1 = inlined_call_operand.hbm [shape: f32[32,144], index: 1, kind: input, shape index: {}]
  %s2 = inlined_call_operand.hbm [shape: f32[144,200], index: 2, kind: input, shape index: {}]
  %s3 = inlined_call_operand.hbm [shape: f32[200,400], index: 3, kind: input, shape index: {}]
  %s4 = inlined_call_operand.hbm [shape: f32[2,400], index: 4, kind: output, shape index: {}]
  %s5 = sld [smem:[#allocation0]]
  $region42: #{tpu_custom_call.1} parent=0
    _
  %s7 = ssub.s32 1, %s5
  %s8 = scalar_select 0, %s7, %s5
  $region1: #{tpu_custom_call.1} parent=0
    #allocation2 [shape = 'u8[1024]{0}', space=vmem, size = 0x400, scoped, tag = 'input window, operand 0, single buffered']
    #allocation3 [shape = 's32[1]{0}', space=sflag, size = 0x4, scoped, tag = 'scoped memory for tpu_custom_call.1']
    #allocation4 [shape = 's32[1]{0}', space=sflag, size = 0x4, scoped, tag = 'scoped memory for tpu_custom_call.1']
    #allocation5 [shape = 'u8[32768]{0}', space=vmem, size = 0x8000, scoped, tag = 'input window, operand 1, single buffered']
    #allocation6 [shape = 's32[1]{0}', space=sflag, size = 0x4, scoped, tag = 'scoped memory for tpu_custom_call.1']
    #allocation7 [shape = 'u8[147456]{0}', space=vmem, size = 0x24000, scoped, tag = 'input window, operand 2, single buffered']
    #allocation8 [shape = 'u8[409600]{0}', space=vmem, size = 0x64000, scoped, tag = 'input window, operand 3, single buffered']
    #allocation9 [shape = 's32[1]{0}', space=sflag, size = 0x4, scoped, tag = 'scoped memory for tpu_custom_call.1']
    #allocation10 [shape = 'u8[4096]{0}', space=vmem, size = 0x1000, scoped, tag = 'output window, operand 0, single buffered']
    %9 = vsyncpa [#allocation3], 0
    %10 = vsyncpa [#allocation6], 0
    %11 = vsyncpa [#allocation9], 0
    %12 = vsyncpa [#allocation4], 0
    // Predicated region
    $region2: #{tpu_custom_call.1} parent=1 // pred_check
      _
    $region3: #{tpu_custom_call.1} parent=1 // pred_check_branch
      %14 = sbr.rel (0) target = $region5
    $region4: #{tpu_custom_call.1} parent=1 // pred_region
      %s16 = ssub.s32 32, 32
      %17 = vsyncadd [#allocation3], %s16
      %s19 = sshll.u32 [#allocation2], 4
      %s20 = int_to_ptr.vmem [resolvable:$true] %s19
      %22 = dma.hbm_to_vmem [thread:$0]  %s0, 32, %s20, [#allocation3]
    $region5: #{tpu_custom_call.1} parent=1 // pred_fallthru
      _
    // Predicated region
    $region6: #{tpu_custom_call.1} parent=1 // pred_check
      _
    $region7: #{tpu_custom_call.1} parent=1 // pred_check_branch
      %24 = sbr.rel (0) target = $region9
    $region8: #{tpu_custom_call.1} parent=1 // pred_region
      %s26 = ssub.s32 1024, 1024
      %27 = vsyncadd [#allocation6], %s26
      %s28 = sshll.u32 [#allocation5], 4
      %s29 = int_to_ptr.vmem [resolvable:$true] %s28
      %34 = dma.hbm_to_vmem [thread:$0]  %s1, 1024, %s29, [#allocation6], 256, 256, 16
    $region9: #{tpu_custom_call.1} parent=1 // pred_fallthru
      _
    // Predicated region
    $region10: #{tpu_custom_call.1} parent=1 // pred_check
      _
    $region11: #{tpu_custom_call.1} parent=1 // pred_check_branch
      %36 = sbr.rel (0) target = $region13
    $region12: #{tpu_custom_call.1} parent=1 // pred_region
      %s38 = ssub.s32 4608, 4608
      %39 = vsyncadd [#allocation6], %s38
      %s40 = sshll.u32 [#allocation7], 4
      %s41 = int_to_ptr.vmem [resolvable:$true] %s40
      %46 = dma.hbm_to_vmem [thread:$0]  %s2, 4608, %s41, [#allocation6], 256, 256, 16
    $region13: #{tpu_custom_call.1} parent=1 // pred_fallthru
      _
    // Predicated region
    $region14: #{tpu_custom_call.1} parent=1 // pred_check
      _
    $region15: #{tpu_custom_call.1} parent=1 // pred_check_branch
      %48 = sbr.rel (0) target = $region17
    $region16: #{tpu_custom_call.1} parent=1 // pred_region
      %s50 = ssub.s32 12800, 12800
      %51 = vsyncadd [#allocation9], %s50
      %s52 = sshll.u32 [#allocation8], 4
      %s53 = int_to_ptr.vmem [resolvable:$true] %s52
      %58 = dma.hbm_to_vmem [thread:$0]  %s3, 12800, %s53, [#allocation9], 512, 512, 32
    $region17: #{tpu_custom_call.1} parent=1 // pred_fallthru
      _
    // Predicated region
    $region18: #{tpu_custom_call.1} parent=1 // pred_check
      _
    $region19: #{tpu_custom_call.1} parent=1 // pred_check_branch
      %60 = sbr.rel (0) target = $region21
    $region20: #{tpu_custom_call.1} parent=1 // pred_region
      %61 = dma.done [#allocation3], 32
    $region21: #{tpu_custom_call.1} parent=1 // pred_fallthru
      _
    // Predicated region
    $region22: #{tpu_custom_call.1} parent=1 // pred_check
      _
    $region23: #{tpu_custom_call.1} parent=1 // pred_check_branch
      %63 = sbr.rel (0) target = $region25
    $region24: #{tpu_custom_call.1} parent=1 // pred_region
      %64 = dma.done [#allocation6], 1024
    $region25: #{tpu_custom_call.1} parent=1 // pred_fallthru
      _
    // Predicated region
    $region26: #{tpu_custom_call.1} parent=1 // pred_check
      _
    $region27: #{tpu_custom_call.1} parent=1 // pred_check_branch
      %66 = sbr.rel (0) target = $region29
    $region28: #{tpu_custom_call.1} parent=1 // pred_region
      %67 = dma.done [#allocation6], 4608
    $region29: #{tpu_custom_call.1} parent=1 // pred_fallthru
      _
    // Predicated region
    $region30: #{tpu_custom_call.1} parent=1 // pred_check
      _
    $region31: #{tpu_custom_call.1} parent=1 // pred_check_branch
      %69 = sbr.rel (0) target = $region33
    $region32: #{tpu_custom_call.1} parent=1 // pred_region
      %70 = dma.done [#allocation9], 12800
    $region33: #{tpu_custom_call.1} parent=1 // pred_fallthru
      _
    %v71 = vld [vmem:[#allocation2] sm:$0x3]
    %v72 = vld [vmem:[#allocation5] sm:$0xff]
    %v73 = vld [vmem:[#allocation5 + $0x8] sm:$0xff]
    %v74 = vld [vmem:[#allocation5 + $0x10] sm:$0xff]
    %v75 = vld [vmem:[#allocation5 + $0x18] sm:$0xff]
    %v76 = vld [vmem:[#allocation5 + $0x20] sm:$0xff]
    %v77 = vld [vmem:[#allocation5 + $0x28] sm:$0xff]
    %v78 = vld [vmem:[#allocation5 + $0x30] sm:$0xff]
    %v79 = vld [vmem:[#allocation5 + $0x38] sm:$0xff]
    %vm80 = vcmask 261120
    %v82 = vsel %vm80, %v71, 0
    %84 = vmatprep.subr.mxu0 %v73
    %85 = vmatpush1.msra.mxu0 %v72
    %86 = vmatprep.subr.mxu0 %v75
    %87 = vmatpush1.msra.mxu0 %v74
    %88 = vmatprep.subr.mxu0 %v77
    %89 = vmatpush1.msra.mxu0 %v76
    %90 = vmatprep.subr.mxu0 %v79
    %91 = vmatpush1.msra.mxu0 %v78
    %92 = vmatprep.subr.mxu0 0.0
    %93 = vmatpush1.msra.mxu0 0.0
    %94 = vmatprep.subr.mxu0 0.0
    %95 = vmatpush1.msra.mxu0 0.0
    %96 = vmatprep.subr.mxu0 0.0
    %97 = vmatpush1.msra.mxu0 0.0
    %98 = vmatprep.subr.mxu0 0.0
    %99 = vmatpush1.msra.mxu0 0.0
    %100 = vmatprep.subr.mxu0 0.0
    %101 = vmatpush1.msra.mxu0 0.0
    %102 = vmatprep.subr.mxu0 0.0
    %103 = vmatpush1.msra.mxu0 0.0
    %104 = vmatprep.subr.mxu0 0.0
    %105 = vmatpush1.msra.mxu0 0.0
    %106 = vmatprep.subr.mxu0 0.0
    %107 = vmatpush1.msra.mxu0 0.0
    %108 = vmatprep.subr.mxu0 0.0
    %109 = vmatpush1.msra.mxu0 0.0
    %110 = vmatprep.subr.mxu0 0.0
    %111 = vmatpush1.msra.mxu0 0.0
    %112 = vmatprep.subr.mxu0 0.0
    %113 = vmatpush1.msra.mxu0 0.0
    %114 = vmatprep.subr.mxu0 0.0
    %115 = vmatpush1.msra.mxu0 0.0
    %116 = vmatprep.subr.mxu0 0.0
    %117 = vmatpush1.msra.mxu0 0.0
    %118 = vmatprep.subr.mxu0 0.0
    %119 = vmatpush1.msra.mxu0 0.0
    %120 = vmatprep.subr.mxu0 0.0
    %121 = vmatpush1.msra.mxu0 0.0
    %122 = vmatprep.subr.mxu0 0.0
    %123 = vmatpush1.msra.mxu0 0.0
    %124 = vmatprep.subr.mxu0 0.0
    %125 = vmatpush1.msra.mxu0 0.0
    %126 = vmatprep.subr.mxu0 0.0
    %127 = vmatpush1.msra.mxu0 0.0
    %128 = vmatprep.subr.mxu0 0.0
    %129 = vmatpush1.msra.mxu0 0.0
    %130 = vmatprep.subr.mxu0 0.0
    %131 = vmatpush1.msra.mxu0 0.0
    %132 = vmatprep.subr.mxu0 0.0
    %133 = vmatpush1.msra.mxu0 0.0
    %134 = vmatprep.subr.mxu0 0.0
    %135 = vmatpush1.msra.mxu0 0.0
    %136 = vmatprep.subr.mxu0 0.0
    %137 = vmatpush1.msra.mxu0 0.0
    %138 = vmatprep.subr.mxu0 0.0
    %139 = vmatpush1.msra.mxu0 0.0
    %140 = vmatprep.subr.mxu0 0.0
    %141 = vmatpush1.msra.mxu0 0.0
    %142 = vmatprep.subr.mxu0 0.0
    %143 = vmatpush1.msra.mxu0 0.0
    %144 = vmatprep.subr.mxu0 0.0
    %145 = vmatpush1.msra.mxu0 0.0
    %146 = vmatprep.subr.mxu0 0.0
    %147 = vmatpush1.msra.mxu0 0.0
    %148 = vmatprep.mubr.f32.mxu0 0.0
    %149 = vmatmul.mubr.f32.gmra.mrb[0].mxu0 %v82
    %v150 = vpop.f32.mrb[0].mxu0
    %v151 = vadd.f32 0.0, %v150
    %v152 = vpop.f32.mrb[0].mxu0
    %v153 = vadd.f32 0.0, %v152
    %154 = vdwg.mxu0
    %v155 = vmax.f32 %v151, 0.0
    %v156 = vmax.f32 %v153, 0.0
    %v157 = vld [vmem:[#allocation7] sm:$0xff]
    %v158 = vld [vmem:[#allocation7 + $0x8] sm:$0xff]
    %v159 = vld [vmem:[#allocation7 + $0x10] sm:$0xff]
    %v160 = vld [vmem:[#allocation7 + $0x18] sm:$0xff]
    %v161 = vld [vmem:[#allocation7 + $0x20] sm:$0xff]
    %v162 = vld [vmem:[#allocation7 + $0x28] sm:$0xff]
    %v163 = vld [vmem:[#allocation7 + $0x30] sm:$0xff]
    %v164 = vld [vmem:[#allocation7 + $0x38] sm:$0xff]
    %v165 = vld [vmem:[#allocation7 + $0x40] sm:$0xff]
    %v166 = vld [vmem:[#allocation7 + $0x48] sm:$0xff]
    %v167 = vld [vmem:[#allocation7 + $0x50] sm:$0xff]
    %v168 = vld [vmem:[#allocation7 + $0x58] sm:$0xff]
    %v169 = vld [vmem:[#allocation7 + $0x60] sm:$0xff]
    %v170 = vld [vmem:[#allocation7 + $0x68] sm:$0xff]
    %v171 = vld [vmem:[#allocation7 + $0x70] sm:$0xff]
    %v172 = vld [vmem:[#allocation7 + $0x78] sm:$0xff]
    %v173 = vld [vmem:[#allocation7 + $0x80] sm:$0xff]
    %v174 = vld [vmem:[#allocation7 + $0x88] sm:$0xff]
    %v175 = vld [vmem:[#allocation7 + $0x90] sm:$0xff]
    %v176 = vld [vmem:[#allocation7 + $0x98] sm:$0xff]
    %v177 = vld [vmem:[#allocation7 + $0xa0] sm:$0xff]
    %v178 = vld [vmem:[#allocation7 + $0xa8] sm:$0xff]
    %v179 = vld [vmem:[#allocation7 + $0xb0] sm:$0xff]
    %v180 = vld [vmem:[#allocation7 + $0xb8] sm:$0xff]
    %v181 = vld [vmem:[#allocation7 + $0xc0] sm:$0xff]
    %v182 = vld [vmem:[#allocation7 + $0xc8] sm:$0xff]
    %v183 = vld [vmem:[#allocation7 + $0xd0] sm:$0xff]
    %v184 = vld [vmem:[#allocation7 + $0xd8] sm:$0xff]
    %v185 = vld [vmem:[#allocation7 + $0xe0] sm:$0xff]
    %v186 = vld [vmem:[#allocation7 + $0xe8] sm:$0xff]
    %v187 = vld [vmem:[#allocation7 + $0xf0] sm:$0xff]
    %v188 = vld [vmem:[#allocation7 + $0xf8] sm:$0xff]
    %v189 = vld [vmem:[#allocation7 + $0x100] sm:$0xff]
    %v190 = vld [vmem:[#allocation7 + $0x108] sm:$0xff]
    %v191 = vld [vmem:[#allocation7 + $0x110] sm:$0xff]
    %v192 = vld [vmem:[#allocation7 + $0x118] sm:$0xff]
    %vm193 = vcmask 130048
    %v195 = vsel %vm193, %v156, 0
    %197 = vmatprep.subr.mxu0 %v158
    %198 = vmatpush1.msra.mxu0 %v157
    %199 = vmatprep.subr.mxu0 %v160
    %200 = vmatpush1.msra.mxu0 %v159
    %201 = vmatprep.subr.mxu0 %v162
    %202 = vmatpush1.msra.mxu0 %v161
    %203 = vmatprep.subr.mxu0 %v164
    %204 = vmatpush1.msra.mxu0 %v163
    %205 = vmatprep.subr.mxu0 %v166
    %206 = vmatpush1.msra.mxu0 %v165
    %207 = vmatprep.subr.mxu0 %v168
    %208 = vmatpush1.msra.mxu0 %v167
    %209 = vmatprep.subr.mxu0 %v170
    %210 = vmatpush1.msra.mxu0 %v169
    %211 = vmatprep.subr.mxu0 %v172
    %212 = vmatpush1.msra.mxu0 %v171
    %213 = vmatprep.subr.mxu0 %v174
    %214 = vmatpush1.msra.mxu0 %v173
    %215 = vmatprep.subr.mxu0 %v176
    %216 = vmatpush1.msra.mxu0 %v175
    %217 = vmatprep.subr.mxu0 %v178
    %218 = vmatpush1.msra.mxu0 %v177
    %219 = vmatprep.subr.mxu0 %v180
    %220 = vmatpush1.msra.mxu0 %v179
    %221 = vmatprep.subr.mxu0 %v182
    %222 = vmatpush1.msra.mxu0 %v181
    %223 = vmatprep.subr.mxu0 %v184
    %224 = vmatpush1.msra.mxu0 %v183
    %225 = vmatprep.subr.mxu0 %v186
    %226 = vmatpush1.msra.mxu0 %v185
    %227 = vmatprep.subr.mxu0 %v188
    %228 = vmatpush1.msra.mxu0 %v187
    %229 = vmatprep.subr.mxu0 %v190
    %230 = vmatpush1.msra.mxu0 %v189
    %231 = vmatprep.subr.mxu0 %v192
    %232 = vmatpush1.msra.mxu0 %v191
    %233 = vmatprep.subr.mxu0 0.0
    %234 = vmatpush1.msra.mxu0 0.0
    %235 = vmatprep.subr.mxu0 0.0
    %236 = vmatpush1.msra.mxu0 0.0
    %237 = vmatprep.subr.mxu0 0.0
    %238 = vmatpush1.msra.mxu0 0.0
    %239 = vmatprep.subr.mxu0 0.0
    %240 = vmatpush1.msra.mxu0 0.0
    %241 = vmatprep.subr.mxu0 0.0
    %242 = vmatpush1.msra.mxu0 0.0
    %243 = vmatprep.subr.mxu0 0.0
    %244 = vmatpush1.msra.mxu0 0.0
    %245 = vmatprep.subr.mxu0 0.0
    %246 = vmatpush1.msra.mxu0 0.0
    %247 = vmatprep.subr.mxu0 0.0
    %248 = vmatpush1.msra.mxu0 0.0
    %249 = vmatprep.subr.mxu0 0.0
    %250 = vmatpush1.msra.mxu0 0.0
    %251 = vmatprep.subr.mxu0 0.0
    %252 = vmatpush1.msra.mxu0 0.0
    %253 = vmatprep.subr.mxu0 0.0
    %254 = vmatpush1.msra.mxu0 0.0
    %255 = vmatprep.subr.mxu0 0.0
    %256 = vmatpush1.msra.mxu0 0.0
    %257 = vmatprep.subr.mxu0 0.0
    %258 = vmatpush1.msra.mxu0 0.0
    %259 = vmatprep.subr.mxu0 0.0
    %260 = vmatpush1.msra.mxu0 0.0
    %261 = vmatprep.mubr.f32.mxu0 %v195
    %262 = vmatmul.mubr.f32.gmra.mrb[0].mxu0 %v155
    %v263 = vpop.f32.mrb[0].mxu0
    %v264 = vadd.f32 0.0, %v263
    %v265 = vpop.f32.mrb[0].mxu0
    %v266 = vadd.f32 0.0, %v265
    %267 = vdwg.mxu0
    %v268 = vmax.f32 %v264, 0.0
    %v269 = vmax.f32 %v266, 0.0
    %v270 = vld [vmem:[#allocation8] sm:$0xff]
    %v271 = vld [vmem:[#allocation8 + $0x8] sm:$0xff]
    %v272 = vld [vmem:[#allocation8 + $0x10] sm:$0xff]
    %v273 = vld [vmem:[#allocation8 + $0x18] sm:$0xff]
    %v274 = vld [vmem:[#allocation8 + $0x20] sm:$0xff]
    %v275 = vld [vmem:[#allocation8 + $0x28] sm:$0xff]
    %v276 = vld [vmem:[#allocation8 + $0x30] sm:$0xff]
    %v277 = vld [vmem:[#allocation8 + $0x38] sm:$0xff]
    %v278 = vld [vmem:[#allocation8 + $0x40] sm:$0xff]
    %v279 = vld [vmem:[#allocation8 + $0x48] sm:$0xff]
    %v280 = vld [vmem:[#allocation8 + $0x50] sm:$0xff]
    %v281 = vld [vmem:[#allocation8 + $0x58] sm:$0xff]
    %v282 = vld [vmem:[#allocation8 + $0x60] sm:$0xff]
    %v283 = vld [vmem:[#allocation8 + $0x68] sm:$0xff]
    %v284 = vld [vmem:[#allocation8 + $0x70] sm:$0xff]
    %v285 = vld [vmem:[#allocation8 + $0x78] sm:$0xff]
    %v286 = vld [vmem:[#allocation8 + $0x80] sm:$0xff]
    %v287 = vld [vmem:[#allocation8 + $0x88] sm:$0xff]
    %v288 = vld [vmem:[#allocation8 + $0x90] sm:$0xff]
    %v289 = vld [vmem:[#allocation8 + $0x98] sm:$0xff]
    %v290 = vld [vmem:[#allocation8 + $0xa0] sm:$0xff]
    %v291 = vld [vmem:[#allocation8 + $0xa8] sm:$0xff]
    %v292 = vld [vmem:[#allocation8 + $0xb0] sm:$0xff]
    %v293 = vld [vmem:[#allocation8 + $0xb8] sm:$0xff]
    %v294 = vld [vmem:[#allocation8 + $0xc0] sm:$0xff]
    %v295 = vld [vmem:[#allocation8 + $0xc8] sm:$0xff]
    %v296 = vld [vmem:[#allocation8 + $0xd0] sm:$0xff]
    %v297 = vld [vmem:[#allocation8 + $0xd8] sm:$0xff]
    %v298 = vld [vmem:[#allocation8 + $0xe0] sm:$0xff]
    %v299 = vld [vmem:[#allocation8 + $0xe8] sm:$0xff]
    %v300 = vld [vmem:[#allocation8 + $0xf0] sm:$0xff]
    %v301 = vld [vmem:[#allocation8 + $0xf8] sm:$0xff]
    %v302 = vld [vmem:[#allocation8 + $0x100] sm:$0xff]
    %v303 = vld [vmem:[#allocation8 + $0x108] sm:$0xff]
    %v304 = vld [vmem:[#allocation8 + $0x110] sm:$0xff]
    %v305 = vld [vmem:[#allocation8 + $0x118] sm:$0xff]
    %v306 = vld [vmem:[#allocation8 + $0x120] sm:$0xff]
    %v307 = vld [vmem:[#allocation8 + $0x128] sm:$0xff]
    %v308 = vld [vmem:[#allocation8 + $0x130] sm:$0xff]
    %v309 = vld [vmem:[#allocation8 + $0x138] sm:$0xff]
    %v310 = vld [vmem:[#allocation8 + $0x140] sm:$0xff]
    %v311 = vld [vmem:[#allocation8 + $0x148] sm:$0xff]
    %v312 = vld [vmem:[#allocation8 + $0x150] sm:$0xff]
    %v313 = vld [vmem:[#allocation8 + $0x158] sm:$0xff]
    %v314 = vld [vmem:[#allocation8 + $0x160] sm:$0xff]
    %v315 = vld [vmem:[#allocation8 + $0x168] sm:$0xff]
    %v316 = vld [vmem:[#allocation8 + $0x170] sm:$0xff]
    %v317 = vld [vmem:[#allocation8 + $0x178] sm:$0xff]
    %v318 = vld [vmem:[#allocation8 + $0x180] sm:$0xff]
    %v319 = vld [vmem:[#allocation8 + $0x188] sm:$0xff]
    %v320 = vld [vmem:[#allocation8 + $0x190] sm:$0xff]
    %v321 = vld [vmem:[#allocation8 + $0x198] sm:$0xff]
    %v322 = vld [vmem:[#allocation8 + $0x1a0] sm:$0xff]
    %v323 = vld [vmem:[#allocation8 + $0x1a8] sm:$0xff]
    %v324 = vld [vmem:[#allocation8 + $0x1b0] sm:$0xff]
    %v325 = vld [vmem:[#allocation8 + $0x1b8] sm:$0xff]
    %v326 = vld [vmem:[#allocation8 + $0x1c0] sm:$0xff]
    %v327 = vld [vmem:[#allocation8 + $0x1c8] sm:$0xff]
    %v328 = vld [vmem:[#allocation8 + $0x1d0] sm:$0xff]
    %v329 = vld [vmem:[#allocation8 + $0x1d8] sm:$0xff]
    %v330 = vld [vmem:[#allocation8 + $0x1e0] sm:$0xff]
    %v331 = vld [vmem:[#allocation8 + $0x1e8] sm:$0xff]
    %v332 = vld [vmem:[#allocation8 + $0x1f0] sm:$0xff]
    %v333 = vld [vmem:[#allocation8 + $0x1f8] sm:$0xff]
    %v334 = vld [vmem:[#allocation8 + $0x200] sm:$0xff]
    %v335 = vld [vmem:[#allocation8 + $0x208] sm:$0xff]
    %v336 = vld [vmem:[#allocation8 + $0x210] sm:$0xff]
    %v337 = vld [vmem:[#allocation8 + $0x218] sm:$0xff]
    %v338 = vld [vmem:[#allocation8 + $0x220] sm:$0xff]
    %v339 = vld [vmem:[#allocation8 + $0x228] sm:$0xff]
    %v340 = vld [vmem:[#allocation8 + $0x230] sm:$0xff]
    %v341 = vld [vmem:[#allocation8 + $0x238] sm:$0xff]
    %v342 = vld [vmem:[#allocation8 + $0x240] sm:$0xff]
    %v343 = vld [vmem:[#allocation8 + $0x248] sm:$0xff]
    %v344 = vld [vmem:[#allocation8 + $0x250] sm:$0xff]
    %v345 = vld [vmem:[#allocation8 + $0x258] sm:$0xff]
    %v346 = vld [vmem:[#allocation8 + $0x260] sm:$0xff]
    %v347 = vld [vmem:[#allocation8 + $0x268] sm:$0xff]
    %v348 = vld [vmem:[#allocation8 + $0x270] sm:$0xff]
    %v349 = vld [vmem:[#allocation8 + $0x278] sm:$0xff]
    %v350 = vld [vmem:[#allocation8 + $0x280] sm:$0xff]
    %v351 = vld [vmem:[#allocation8 + $0x288] sm:$0xff]
    %v352 = vld [vmem:[#allocation8 + $0x290] sm:$0xff]
    %v353 = vld [vmem:[#allocation8 + $0x298] sm:$0xff]
    %v354 = vld [vmem:[#allocation8 + $0x2a0] sm:$0xff]
    %v355 = vld [vmem:[#allocation8 + $0x2a8] sm:$0xff]
    %v356 = vld [vmem:[#allocation8 + $0x2b0] sm:$0xff]
    %v357 = vld [vmem:[#allocation8 + $0x2b8] sm:$0xff]
    %v358 = vld [vmem:[#allocation8 + $0x2c0] sm:$0xff]
    %v359 = vld [vmem:[#allocation8 + $0x2c8] sm:$0xff]
    %v360 = vld [vmem:[#allocation8 + $0x2d0] sm:$0xff]
    %v361 = vld [vmem:[#allocation8 + $0x2d8] sm:$0xff]
    %v362 = vld [vmem:[#allocation8 + $0x2e0] sm:$0xff]
    %v363 = vld [vmem:[#allocation8 + $0x2e8] sm:$0xff]
    %v364 = vld [vmem:[#allocation8 + $0x2f0] sm:$0xff]
    %v365 = vld [vmem:[#allocation8 + $0x2f8] sm:$0xff]
    %v366 = vld [vmem:[#allocation8 + $0x300] sm:$0xff]
    %v367 = vld [vmem:[#allocation8 + $0x308] sm:$0xff]
    %v368 = vld [vmem:[#allocation8 + $0x310] sm:$0xff]
    %v369 = vld [vmem:[#allocation8 + $0x318] sm:$0xff]
    %vm370 = vcmask 588800
    %v372 = vsel %vm370, %v269, 0
    %374 = vmatprep.subr.mxu0 %v271
    %375 = vmatpush1.msra.mxu0 %v270
    %376 = vmatprep.subr.mxu0 %v275
    %377 = vmatpush1.msra.mxu0 %v274
    %378 = vmatprep.subr.mxu0 %v279
    %379 = vmatpush1.msra.mxu0 %v278
    %380 = vmatprep.subr.mxu0 %v283
    %381 = vmatpush1.msra.mxu0 %v282
    %382 = vmatprep.subr.mxu0 %v287
    %383 = vmatpush1.msra.mxu0 %v286
    %384 = vmatprep.subr.mxu0 %v291
    %385 = vmatpush1.msra.mxu0 %v290
    %386 = vmatprep.subr.mxu0 %v295
    %387 = vmatpush1.msra.mxu0 %v294
    %388 = vmatprep.subr.mxu0 %v299
    %389 = vmatpush1.msra.mxu0 %v298
    %390 = vmatprep.subr.mxu0 %v303
    %391 = vmatpush1.msra.mxu0 %v302
    %392 = vmatprep.subr.mxu0 %v307
    %393 = vmatpush1.msra.mxu0 %v306
    %394 = vmatprep.subr.mxu0 %v311
    %395 = vmatpush1.msra.mxu0 %v310
    %396 = vmatprep.subr.mxu0 %v315
    %397 = vmatpush1.msra.mxu0 %v314
    %398 = vmatprep.subr.mxu0 %v319
    %399 = vmatpush1.msra.mxu0 %v318
    %400 = vmatprep.subr.mxu0 %v323
    %401 = vmatpush1.msra.mxu0 %v322
    %402 = vmatprep.subr.mxu0 %v327
    %403 = vmatpush1.msra.mxu0 %v326
    %404 = vmatprep.subr.mxu0 %v331
    %405 = vmatpush1.msra.mxu0 %v330
    %406 = vmatprep.subr.mxu0 %v335
    %407 = vmatpush1.msra.mxu0 %v334
    %408 = vmatprep.subr.mxu0 %v339
    %409 = vmatpush1.msra.mxu0 %v338
    %410 = vmatprep.subr.mxu0 %v343
    %411 = vmatpush1.msra.mxu0 %v342
    %412 = vmatprep.subr.mxu0 %v347
    %413 = vmatpush1.msra.mxu0 %v346
    %414 = vmatprep.subr.mxu0 %v351
    %415 = vmatpush1.msra.mxu0 %v350
    %416 = vmatprep.subr.mxu0 %v355
    %417 = vmatpush1.msra.mxu0 %v354
    %418 = vmatprep.subr.mxu0 %v359
    %419 = vmatpush1.msra.mxu0 %v358
    %420 = vmatprep.subr.mxu0 %v363
    %421 = vmatpush1.msra.mxu0 %v362
    %422 = vmatprep.subr.mxu0 %v367
    %423 = vmatpush1.msra.mxu0 %v366
    %424 = vmatprep.subr.mxu0 0.0
    %425 = vmatpush1.msra.mxu0 0.0
    %426 = vmatprep.subr.mxu0 0.0
    %427 = vmatpush1.msra.mxu0 0.0
    %428 = vmatprep.subr.mxu0 0.0
    %429 = vmatpush1.msra.mxu0 0.0
    %430 = vmatprep.subr.mxu0 0.0
    %431 = vmatpush1.msra.mxu0 0.0
    %432 = vmatprep.subr.mxu0 0.0
    %433 = vmatpush1.msra.mxu0 0.0
    %434 = vmatprep.subr.mxu0 0.0
    %435 = vmatpush1.msra.mxu0 0.0
    %436 = vmatprep.subr.mxu0 0.0
    %437 = vmatpush1.msra.mxu0 0.0
    %438 = vmatprep.mubr.f32.mxu0 %v372
    %439 = vmatmul.mubr.f32.gmra.mrb[0].mxu0 %v268
    %v440 = vpop.f32.mrb[0].mxu0
    %v441 = vadd.f32 0.0, %v440
    %v442 = vpop.f32.mrb[0].mxu0
    %v443 = vadd.f32 0.0, %v442
    %444 = vdwg.mxu0
    %445 = vmatprep.subr.mxu0 %v273
    %446 = vmatpush1.msra.mxu0 %v272
    %447 = vmatprep.subr.mxu0 %v277
    %448 = vmatpush1.msra.mxu0 %v276
    %449 = vmatprep.subr.mxu0 %v281
    %450 = vmatpush1.msra.mxu0 %v280
    %451 = vmatprep.subr.mxu0 %v285
    %452 = vmatpush1.msra.mxu0 %v284
    %453 = vmatprep.subr.mxu0 %v289
    %454 = vmatpush1.msra.mxu0 %v288
    %455 = vmatprep.subr.mxu0 %v293
    %456 = vmatpush1.msra.mxu0 %v292
    %457 = vmatprep.subr.mxu0 %v297
    %458 = vmatpush1.msra.mxu0 %v296
    %459 = vmatprep.subr.mxu0 %v301
    %460 = vmatpush1.msra.mxu0 %v300
    %461 = vmatprep.subr.mxu0 %v305
    %462 = vmatpush1.msra.mxu0 %v304
    %463 = vmatprep.subr.mxu0 %v309
    %464 = vmatpush1.msra.mxu0 %v308
    %465 = vmatprep.subr.mxu0 %v313
    %466 = vmatpush1.msra.mxu0 %v312
    %467 = vmatprep.subr.mxu0 %v317
    %468 = vmatpush1.msra.mxu0 %v316
    %469 = vmatprep.subr.mxu0 %v321
    %470 = vmatpush1.msra.mxu0 %v320
    %471 = vmatprep.subr.mxu0 %v325
    %472 = vmatpush1.msra.mxu0 %v324
    %473 = vmatprep.subr.mxu0 %v329
    %474 = vmatpush1.msra.mxu0 %v328
    %475 = vmatprep.subr.mxu0 %v333
    %476 = vmatpush1.msra.mxu0 %v332
    %477 = vmatprep.subr.mxu0 %v337
    %478 = vmatpush1.msra.mxu0 %v336
    %479 = vmatprep.subr.mxu0 %v341
    %480 = vmatpush1.msra.mxu0 %v340
    %481 = vmatprep.subr.mxu0 %v345
    %482 = vmatpush1.msra.mxu0 %v344
    %483 = vmatprep.subr.mxu0 %v349
    %484 = vmatpush1.msra.mxu0 %v348
    %485 = vmatprep.subr.mxu0 %v353
    %486 = vmatpush1.msra.mxu0 %v352
    %487 = vmatprep.subr.mxu0 %v357
    %488 = vmatpush1.msra.mxu0 %v356
    %489 = vmatprep.subr.mxu0 %v361
    %490 = vmatpush1.msra.mxu0 %v360
    %491 = vmatprep.subr.mxu0 %v365
    %492 = vmatpush1.msra.mxu0 %v364
    %493 = vmatprep.subr.mxu0 %v369
    %494 = vmatpush1.msra.mxu0 %v368
    %495 = vmatprep.subr.mxu0 0.0
    %496 = vmatpush1.msra.mxu0 0.0
    %497 = vmatprep.subr.mxu0 0.0
    %498 = vmatpush1.msra.mxu0 0.0
    %499 = vmatprep.subr.mxu0 0.0
    %500 = vmatpush1.msra.mxu0 0.0
    %501 = vmatprep.subr.mxu0 0.0
    %502 = vmatpush1.msra.mxu0 0.0
    %503 = vmatprep.subr.mxu0 0.0
    %504 = vmatpush1.msra.mxu0 0.0
    %505 = vmatprep.subr.mxu0 0.0
    %506 = vmatpush1.msra.mxu0 0.0
    %507 = vmatprep.subr.mxu0 0.0
    %508 = vmatpush1.msra.mxu0 0.0
    %509 = vmatprep.mubr.f32.mxu0 %v372
    %510 = vmatmul.mubr.f32.gmra.mrb[0].mxu0 %v268
    %v511 = vpop.f32.mrb[0].mxu0
    %v512 = vadd.f32 0.0, %v511
    %v513 = vpop.f32.mrb[0].mxu0
    %v514 = vadd.f32 0.0, %v513
    %515 = vdwg.mxu0
    %v516 = vsub.f32 0.0, %v441
    %v517 = vsub.f32 0.0, %v443
    %v518 = vsub.f32 0.0, %v512
    %v519 = vsub.f32 0.0, %v514
    %v520 = vmul.f32 %v516, 1.442695
    %v521 = vpow.pop %v520
    %v522 = vmul.f32 %v517, 1.442695
    %v523 = vpow.pop %v522
    %v524 = vmul.f32 %v518, 1.442695
    %v525 = vpow.pop %v524
    %v526 = vmul.f32 %v519, 1.442695
    %v527 = vpow.pop %v526
    %v528 = vadd.f32 %v521, 1.0
    %v529 = vadd.f32 %v523, 1.0
    %v530 = vadd.f32 %v525, 1.0
    %v531 = vadd.f32 %v527, 1.0
    %v532 = vrcp.pop %v528
    %v533 = vmul.f32 1.0, %v532
    %v534 = vrcp.pop %v529
    %v535 = vmul.f32 1.0, %v534
    %v536 = vrcp.pop %v530
    %v537 = vmul.f32 1.0, %v536
    %v538 = vrcp.pop %v531
    %v539 = vmul.f32 1.0, %v538
    %v544 = vcombine.low %v533, %v535
    %v545 = vcombine.low %v537, %v539
    %v547 = vunpack.c.l.s4 1983009808
    %v548 = vunpack.c.0.s8 %v547
    %v549 = vlaneseq
    %v550 = vshrl.u32 %v549, 7
    %v551 = vsub.s32 %v548, %v550
    %v552 = vrot.slane %v544, %v551
    %v554 = vunpack.c.l.s4 1983009808
    %v555 = vunpack.c.0.s8 %v554
    %v556 = vlaneseq
    %v557 = vshrl.u32 %v556, 7
    %v558 = vsub.s32 %v555, %v557
    %v559 = vrot.slane %v545, %v558
    %v560 = vcombine.low %v552, %v559
    %vm562 = vcmask 1041408
    %vm563 = vcmask 1043458
    %vm564 = vmor %vm563, %vm562
    %vm565 = vcmask 1045508
    %vm566 = vmor %vm565, %vm564
    %vm567 = vcmask 130054
    %vm568 = vmor %vm567, %vm566
    %569 = vst.msk [vmem:[#allocation10] sm:$0xff] %vm568, %v560
    // Predicated region
    $region34: #{tpu_custom_call.1} parent=1 // pred_check
      _
    $region35: #{tpu_custom_call.1} parent=1 // pred_check_branch
      %571 = sbr.rel (0) target = $region37
    $region36: #{tpu_custom_call.1} parent=1 // pred_region
      %s573 = ssub.s32 128, 128
      %574 = vsyncadd [#allocation4], %s573
      %s576 = sshll.u32 [#allocation10], 4
      %s577 = int_to_ptr.vmem [resolvable:$true] %s576
      %579 = dma.vmem_to_hbm [thread:$0]  %s577, 128, %s4, [#allocation4]
    $region37: #{tpu_custom_call.1} parent=1 // pred_fallthru
      _
    // Predicated region
    $region38: #{tpu_custom_call.1} parent=1 // pred_check
      _
    $region39: #{tpu_custom_call.1} parent=1 // pred_check_branch
      %581 = sbr.rel (0) target = $region41
    $region40: #{tpu_custom_call.1} parent=1 // pred_region
      %582 = dma.done [#allocation4], 128
    $region41: #{tpu_custom_call.1} parent=1 // pred_fallthru
      _
    %583 = vsyncpa [#allocation3], 1
    %584 = vsyncpa [#allocation6], 1
    %585 = vsyncpa [#allocation9], 1
    %586 = vsyncpa [#allocation4], 1

</llo_original>
